<compile_context>
chip_gen: v7x
topology: tpu7x:2x2x1
jax: 0.10.0
libtpu: 0.0.40
codegen_flags: <defaults>
</compile_context>

<pallas_src>
import functools

import jax
import jax.numpy as jnp
from jax.experimental import pallas as pl
from jax.experimental.pallas import tpu as pltpu

LANE = 128      # TPU lane width: pad last output dim to this for unmasked stores
SUBLANE = 8     # f32 sublane width


def ensemble_kernel(x_ref, wc_ref, bc_ref, wl_ref, bl_ref, o_ref):
    """One batch tile: fused(concat of sub-model Linears) -> Linear -> Sigmoid."""
    x = x_ref[...]                                                    # [TB, D_in] bf16
    # cat([m(x) for m in models], dim=1) == x @ [W1^T|W2^T|...] + [b1|b2|...]
    h = jnp.dot(x, wc_ref[...], preferred_element_type=jnp.float32)   # MXU, f32 acc
    h = h + bc_ref[...]                                               # f32 bias (VPU)
    # ensemble linear layer (weight lane-padded to 128 output columns)
    y = jnp.dot(h.astype(wl_ref.dtype), wl_ref[...],
                preferred_element_type=jnp.float32)                   # MXU, f32 acc
    y = y + bl_ref[...]
    # sigmoid(y) == 0.5*tanh(0.5*y) + 0.5 : single EUP op, numerically robust.
    o_ref[...] = 0.5 * jnp.tanh(0.5 * y) + 0.5


def prepare_ensemble_params(sub_weights, sub_biases, lin_w, lin_b,
                            compute_dtype=jnp.bfloat16):
    """One-time parameter glue, hoisted out of the per-call hot path.

    sub_weights[i]: [out_i, D_in]  (torch nn.Linear layout)
    sub_biases[i] : [out_i]
    lin_w         : [out_n, sum(out_i)]
    lin_b         : [out_n]
    Returns ((wc, bc, wl, bl), out_n) with the ensemble weight padded to 128 lanes.
    """
    out_n = lin_w.shape[0]
    n_pad = (-out_n) % LANE
    wc = jnp.concatenate([w.T for w in sub_weights], axis=1).astype(compute_dtype)  # [D_in, S]
    bc = jnp.concatenate(sub_biases, axis=0).reshape(1, -1).astype(jnp.float32)     # [1, S]
    wl = jnp.pad(lin_w.T, ((0, 0), (0, n_pad))).astype(compute_dtype)               # [S, 128k]
    bl = jnp.pad(lin_b, (0, n_pad)).reshape(1, -1).astype(jnp.float32)              # [1, 128k]
    return (wc, bc, wl, bl), out_n


def _pick_batch_tile(B):
    # Largest convenient multiple of the sublane width; >=256 once B is large enough
    # so x/output DMAs pipeline behind the matmuls. Tiny B just uses one 8-row tile.
    for tb in (512, 256, 128, 64, 32, 16, 8):
        if B >= tb:
            return tb
    return SUBLANE


@functools.partial(jax.jit, static_argnums=(5,))
def ensemble_forward(x, wc, bc, wl, bl, out_n):
    """x: [B, D_in] f32/bf16. Returns sigmoid(linear(cat(sub_models(x)))) : [B, out_n]."""
    B, D_in = x.shape
    S = wc.shape[1]
    OUTP = wl.shape[1]                       # out_n padded to a multiple of 128

    tb = _pick_batch_tile(B)
    Bp = pl.cdiv(B, tb) * tb
    if Bp != B:
        x = jnp.pad(x, ((0, Bp - B), (0, 0)))
    x = x.astype(wc.dtype)                   # bf16 matmul inputs -> full MXU rate

    out = pl.pallas_call(
        ensemble_kernel,
        out_shape=jax.ShapeDtypeStruct((Bp, OUTP), jnp.float32),
        grid_spec=pltpu.PrefetchScalarGridSpec(
            num_scalar_prefetch=0,
            grid=(Bp // tb,),
            in_specs=[
                pl.BlockSpec((tb, D_in), lambda i: (i, 0)),   # x: tiled over batch
                pl.BlockSpec((D_in, S), lambda i: (0, 0)),    # fused sub-model weights (resident)
                pl.BlockSpec((1, S), lambda i: (0, 0)),       # fused sub-model biases (f32)
                pl.BlockSpec((S, OUTP), lambda i: (0, 0)),    # ensemble weight (lane-padded)
                pl.BlockSpec((1, OUTP), lambda i: (0, 0)),    # ensemble bias (lane-padded, f32)
            ],
            out_specs=pl.BlockSpec((tb, OUTP), lambda i: (i, 0)),
        ),
        compiler_params=pltpu.CompilerParams(
            dimension_semantics=("parallel",),        # batch axis shards across TCs (v7x)
            vmem_limit_bytes=32 * 1024 * 1024,        # budget also valid on v7x's 64 MiB VMEM
        ),
    )(x, wc, bc, wl, bl)

    return out[:B, :out_n]                   # drop batch padding + lane padding


def reference_forward(x, sub_weights, sub_biases, lin_w, lin_b):
    outs = [x @ w.T + b for w, b in zip(sub_weights, sub_biases)]
    h = jnp.concatenate(outs, axis=1)
    return jax.nn.sigmoid(h @ lin_w.T + lin_b)


if __name__ == "__main__":
    key = jax.random.PRNGKey(0)

    # Small shapes consistent with the module's forward.
    B, D_in = 8, 32
    models_output_neurons = [16, 16, 32]   # modelsOutputNeurosNum
    out_n = 8                              # outputNeurosNum

    keys = jax.random.split(key, 2 * len(models_output_neurons) + 3)
    x = jax.random.normal(keys[0], (B, D_in), dtype=jnp.float32)

    # Deterministic sub-model (Linear) parameters, torch layout [out, in].
    sub_weights, sub_biases = [], []
    for i, o in enumerate(models_output_neurons):
        sub_weights.append(0.1 * jax.random.normal(keys[1 + 2 * i], (o, D_in), jnp.float32))
        sub_biases.append(0.1 * jax.random.normal(keys[2 + 2 * i], (o,), jnp.float32))

    # Ensemble linear parameters.
    lin_w = 0.1 * jax.random.normal(keys[-2], (out_n, sum(models_output_neurons)), jnp.float32)
    lin_b = 0.1 * jax.random.normal(keys[-1], (out_n,), jnp.float32)

    # One-time parameter prep (outside the per-call path).
    (wc, bc, wl, bl), n_out = prepare_ensemble_params(sub_weights, sub_biases, lin_w, lin_b)

    out = ensemble_forward(x, wc, bc, wl, bl, n_out)
    out = jax.block_until_ready(out)

    ref = reference_forward(x, sub_weights, sub_biases, lin_w, lin_b)
    assert out.shape == (B, out_n)
    # bf16 matmul inputs vs f32 reference -> loose-but-tight-enough tolerance on [0,1] outputs.
    assert jnp.allclose(out, ref, atol=5e-3, rtol=0.0), "mismatch vs JAX reference"

    print("KERNEL_OK")
</pallas_src>

<mosaic_0001>
module attributes {stable_mosaic.version = 11 : i64} {
  func.func @ensemble_kernel(%arg0: i32, %arg1: memref<8x32xbf16, #tpu.memory_space<vmem>>, %arg2: memref<32x64xbf16, #tpu.memory_space<vmem>>, %arg3: memref<1x64xf32, #tpu.memory_space<vmem>>, %arg4: memref<64x128xbf16, #tpu.memory_space<vmem>>, %arg5: memref<1x128xf32, #tpu.memory_space<vmem>>, %arg6: memref<8x128xf32, #tpu.memory_space<vmem>>) attributes {dimension_semantics = [#tpu.dimension_semantics<parallel>], iteration_bounds = array<i64: 1>, scalar_prefetch = 0 : i64, scratch_operands = 0 : i64, tpu.core_type = #tpu.core_type<tc>, window_params = [{transform_indices = @transform_0, window_bounds = array<i64: 8, 32>}, {pipeline_mode = #tpu.pipeline_mode<synchronous>, transform_indices = @transform_1, window_bounds = array<i64: 32, 64>}, {pipeline_mode = #tpu.pipeline_mode<synchronous>, transform_indices = @transform_2, window_bounds = array<i64: 1, 64>}, {pipeline_mode = #tpu.pipeline_mode<synchronous>, transform_indices = @transform_3, window_bounds = array<i64: 64, 128>}, {pipeline_mode = #tpu.pipeline_mode<synchronous>, transform_indices = @transform_4, window_bounds = array<i64: 1, 128>}, {transform_indices = @transform_5, window_bounds = array<i64: 8, 128>}]} {
    %c0 = arith.constant 0 : index
    %c0_0 = arith.constant 0 : index
    %0 = vector.load %arg1[%c0, %c0_0] : memref<8x32xbf16, #tpu.memory_space<vmem>>, vector<8x32xbf16>
    %c0_1 = arith.constant 0 : index
    %c0_2 = arith.constant 0 : index
    %1 = vector.load %arg2[%c0_1, %c0_2] : memref<32x64xbf16, #tpu.memory_space<vmem>>, vector<32x64xbf16>
    %cst = arith.constant dense<0.000000e+00> : vector<8x64xf32>
    %2 = tpu.matmul %0, %1, %cst {dimension_numbers = #tpu.dot_dimension_numbers<[1], [0], [0], [1], [0, 0, 1, 1], [], []>} : vector<8x32xbf16>, vector<32x64xbf16>, vector<8x64xf32> -> vector<8x64xf32>
    %c0_3 = arith.constant 0 : index
    %c0_4 = arith.constant 0 : index
    %3 = vector.load %arg3[%c0_3, %c0_4] : memref<1x64xf32, #tpu.memory_space<vmem>>, vector<1x64xf32>
    %4 = vector.broadcast %3 : vector<1x64xf32> to vector<8x64xf32>
    %5 = arith.addf %2, %4 : vector<8x64xf32>
    %6 = arith.truncf %5 : vector<8x64xf32> to vector<8x64xbf16>
    %c0_5 = arith.constant 0 : index
    %c0_6 = arith.constant 0 : index
    %7 = vector.load %arg4[%c0_5, %c0_6] : memref<64x128xbf16, #tpu.memory_space<vmem>>, vector<64x128xbf16>
    %cst_7 = arith.constant dense<0.000000e+00> : vector<8x128xf32>
    %8 = tpu.matmul %6, %7, %cst_7 {dimension_numbers = #tpu.dot_dimension_numbers<[1], [0], [0], [1], [0, 0, 1, 1], [], []>} : vector<8x64xbf16>, vector<64x128xbf16>, vector<8x128xf32> -> vector<8x128xf32>
    %c0_8 = arith.constant 0 : index
    %c0_9 = arith.constant 0 : index
    %9 = vector.load %arg5[%c0_8, %c0_9] : memref<1x128xf32, #tpu.memory_space<vmem>>, vector<1x128xf32>
    %10 = vector.broadcast %9 : vector<1x128xf32> to vector<8x128xf32>
    %11 = arith.addf %8, %10 : vector<8x128xf32>
    %cst_10 = arith.constant 5.000000e-01 : f32
    %12 = vector.broadcast %cst_10 : f32 to vector<8x128xf32>
    %13 = arith.mulf %12, %11 : vector<8x128xf32>
    %14 = math.tanh %13 : vector<8x128xf32>
    %cst_11 = arith.constant 5.000000e-01 : f32
    %15 = vector.broadcast %cst_11 : f32 to vector<8x128xf32>
    %16 = arith.mulf %15, %14 : vector<8x128xf32>
    %cst_12 = arith.constant 5.000000e-01 : f32
    %17 = vector.broadcast %cst_12 : f32 to vector<8x128xf32>
    %18 = arith.addf %16, %17 : vector<8x128xf32>
    %c0_13 = arith.constant 0 : index
    %c0_14 = arith.constant 0 : index
    %19 = vector.load %arg6[%c0_13, %c0_14] : memref<8x128xf32, #tpu.memory_space<vmem>>, vector<8x128xf32>
    tpu.vector_store %arg6[%c0_13, %c0_14], %18 {strides = array<i32>} : memref<8x128xf32, #tpu.memory_space<vmem>>, vector<8x128xf32>,
    return
  }
  func.func @transform_0(%arg0: i32) -> (i32, i32) {
    %c0_i32 = arith.constant 0 : i32
    %c0_i32_0 = arith.constant 0 : i32
    return %arg0, %c0_i32 : i32, i32
  }
  func.func @transform_1(%arg0: i32) -> (i32, i32) {
    %c0_i32 = arith.constant 0 : i32
    %c0_i32_0 = arith.constant 0 : i32
    %c0_i32_1 = arith.constant 0 : i32
    return %c0_i32, %c0_i32_0 : i32, i32
  }
  func.func @transform_2(%arg0: i32) -> (i32, i32) {
    %c0_i32 = arith.constant 0 : i32
    %c0_i32_0 = arith.constant 0 : i32
    %c0_i32_1 = arith.constant 0 : i32
    return %c0_i32, %c0_i32_0 : i32, i32
  }
  func.func @transform_3(%arg0: i32) -> (i32, i32) {
    %c0_i32 = arith.constant 0 : i32
    %c0_i32_0 = arith.constant 0 : i32
    %c0_i32_1 = arith.constant 0 : i32
    return %c0_i32, %c0_i32_0 : i32, i32
  }
  func.func @transform_4(%arg0: i32) -> (i32, i32) {
    %c0_i32 = arith.constant 0 : i32
    %c0_i32_0 = arith.constant 0 : i32
    %c0_i32_1 = arith.constant 0 : i32
    return %c0_i32, %c0_i32_0 : i32, i32
  }
  func.func @transform_5(%arg0: i32) -> (i32, i32) {
    %c0_i32 = arith.constant 0 : i32
    %c0_i32_0 = arith.constant 0 : i32
    return %arg0, %c0_i32 : i32, i32
  }
}

</mosaic_0001>

<llo_original>
// kernel: ensemble_forward.1
$region0: #{ensemble_forward.1}
  #allocation0 [shape = 'u32[]', space=smem, size = 0x4, offset = 0x4, fixed_abs, tag = 'smem constant byte address 0x4 - core index']
  #allocation1 [shape = 'u32[144,128]{1,0:T(1,128)}', space=vmem, size = 0x12000, scoped, tag = 'internal scratch']
  %s0 = inlined_call_operand.vmem [shape: bf16[8,32], index: 0, kind: input, shape index: {}]
  %s1 = inlined_call_operand.hbm [shape: bf16[32,64], index: 1, kind: input, shape index: {}]
  %s2 = inlined_call_operand.vmem [shape: f32[1,64], index: 2, kind: input, shape index: {}]
  %s3 = inlined_call_operand.hbm [shape: bf16[64,128], index: 3, kind: input, shape index: {}]
  %s4 = inlined_call_operand.vmem [shape: f32[1,128], index: 4, kind: input, shape index: {}]
  %s5 = inlined_call_operand.hbm [shape: f32[8,128], index: 5, kind: output, shape index: {}]
  %s6 = sld [smem:[#allocation0]]
  $region38: #{ensemble_forward.1} parent=0
    _
  %s8 = ssub.s32 1, %s6
  %s9 = scalar_select 0, %s8, %s6
  $region1: #{ensemble_forward.1} parent=0
    #allocation2 [shape = 'u8[8192]{0}', space=vmem, size = 0x2000, scoped, tag = 'input window, operand 1, single buffered']
    #allocation3 [shape = 's32[1]{0}', space=sflag, size = 0x4, scoped, tag = 'scoped memory for ensemble_forward.1']
    #allocation4 [shape = 's32[1]{0}', space=sflag, size = 0x4, scoped, tag = 'scoped memory for ensemble_forward.1']
    #allocation5 [shape = 'u8[16384]{0}', space=vmem, size = 0x4000, scoped, tag = 'input window, operand 3, single buffered']
    #allocation6 [shape = 's32[1]{0}', space=sflag, size = 0x4, scoped, tag = 'scoped memory for ensemble_forward.1']
    #allocation7 [shape = 'u8[4096]{0}', space=vmem, size = 0x1000, scoped, tag = 'output window, operand 0, single buffered']
    %10 = vsyncpa [#allocation3], 0
    %11 = vsyncpa [#allocation6], 0
    %12 = vsyncpa [#allocation4], 0
    // Predicated region
    $region2: #{ensemble_forward.1} parent=1 // pred_check
      _
    $region3: #{ensemble_forward.1} parent=1 // pred_check_branch
      %14 = sbr.rel (0) target = $region5
    $region4: #{ensemble_forward.1} parent=1 // pred_region
      _
    $region5: #{ensemble_forward.1} parent=1 // pred_fallthru
      _
    // Predicated region
    $region6: #{ensemble_forward.1} parent=1 // pred_check
      _
    $region7: #{ensemble_forward.1} parent=1 // pred_check_branch
      %16 = sbr.rel (0) target = $region9
    $region8: #{ensemble_forward.1} parent=1 // pred_region
      %s18 = ssub.s32 256, 256
      %19 = vsyncadd [#allocation3], %s18
      %s20 = sshll.u32 [#allocation2], 4
      %s21 = int_to_ptr.vmem [resolvable:$true] %s20
      %26 = dma.hbm_to_vmem [thread:$0]  %s1, 256, %s21, [#allocation3], 64, 64, 4
    $region9: #{ensemble_forward.1} parent=1 // pred_fallthru
      _
    // Predicated region
    $region10: #{ensemble_forward.1} parent=1 // pred_check
      _
    $region11: #{ensemble_forward.1} parent=1 // pred_check_branch
      %28 = sbr.rel (0) target = $region13
    $region12: #{ensemble_forward.1} parent=1 // pred_region
      _
    $region13: #{ensemble_forward.1} parent=1 // pred_fallthru
      _
    // Predicated region
    $region14: #{ensemble_forward.1} parent=1 // pred_check
      _
    $region15: #{ensemble_forward.1} parent=1 // pred_check_branch
      %30 = sbr.rel (0) target = $region17
    $region16: #{ensemble_forward.1} parent=1 // pred_region
      %s32 = ssub.s32 512, 512
      %33 = vsyncadd [#allocation6], %s32
      %s34 = sshll.u32 [#allocation5], 4
      %s35 = int_to_ptr.vmem [resolvable:$true] %s34
      %40 = dma.hbm_to_vmem [thread:$0]  %s3, 512, %s35, [#allocation6], 64, 64, 4
    $region17: #{ensemble_forward.1} parent=1 // pred_fallthru
      _
    // Predicated region
    $region18: #{ensemble_forward.1} parent=1 // pred_check
      _
    $region19: #{ensemble_forward.1} parent=1 // pred_check_branch
      %42 = sbr.rel (0) target = $region21
    $region20: #{ensemble_forward.1} parent=1 // pred_region
      _
    $region21: #{ensemble_forward.1} parent=1 // pred_fallthru
      _
    // Predicated region
    $region22: #{ensemble_forward.1} parent=1 // pred_check
      _
    $region23: #{ensemble_forward.1} parent=1 // pred_check_branch
      %44 = sbr.rel (0) target = $region25
    $region24: #{ensemble_forward.1} parent=1 // pred_region
      %45 = dma.done [#allocation3], 256
    $region25: #{ensemble_forward.1} parent=1 // pred_fallthru
      _
    // Predicated region
    $region26: #{ensemble_forward.1} parent=1 // pred_check
      _
    $region27: #{ensemble_forward.1} parent=1 // pred_check_branch
      %47 = sbr.rel (0) target = $region29
    $region28: #{ensemble_forward.1} parent=1 // pred_region
      %48 = dma.done [#allocation6], 512
    $region29: #{ensemble_forward.1} parent=1 // pred_fallthru
      _
    %v50 = vld [vmem:[%s0] sm:$0xf]
    %v51 = vld [vmem:[#allocation2] sm:$0xf]
    %v52 = vld [vmem:[#allocation2 + $0x4] sm:$0xf]
    %v53 = vld [vmem:[#allocation2 + $0x8] sm:$0xf]
    %v54 = vld [vmem:[#allocation2 + $0xc] sm:$0xf]
    %v55 = vld [vmem:[%s2] sm:$0x1]
    %v57 = vlaneseq
    %v58 = vshrl.u32 %v57, 7
    %v59 = vsub.s32 0, %v58
    %v60 = vrot.slane %v55, %v59
    %v66 = vunpack.c.l.b16 %v51
    %v67 = vunpack.c.l.b16 %v52
    %v68 = vunpack.c.l.b16 %v53
    %v69 = vunpack.c.l.b16 %v54
    %v70 = vpack.c.b16 %v67, %v66
    %v71 = vpack.c.b16 %v69, %v68
    %vm74 = vcmask 261120
    %v76 = vsel %vm74, %v50, 0
    %78 = vmatprep.subr.bf16.mxu0 0
    %79 = vmatpush1.bf16.msra.mxu0 %v70
    %80 = vmatprep.subr.bf16.mxu0 0
    %81 = vmatpush1.bf16.msra.mxu0 %v71
    %82 = vmatprep.subr.bf16.mxu0 0
    %83 = vmatpush1.bf16.msra.mxu0 0
    %84 = vmatprep.subr.bf16.mxu0 0
    %85 = vmatpush1.bf16.msra.mxu0 0
    %86 = vmatprep.subr.bf16.mxu0 0
    %87 = vmatpush1.bf16.msra.mxu0 0
    %88 = vmatprep.subr.bf16.mxu0 0
    %89 = vmatpush1.bf16.msra.mxu0 0
    %90 = vmatprep.subr.bf16.mxu0 0
    %91 = vmatpush1.bf16.msra.mxu0 0
    %92 = vmatprep.subr.bf16.mxu0 0
    %93 = vmatpush1.bf16.msra.mxu0 0
    %94 = vmatprep.subr.bf16.mxu0 0
    %95 = vmatpush1.bf16.msra.mxu0 0
    %96 = vmatprep.subr.bf16.mxu0 0
    %97 = vmatpush1.bf16.msra.mxu0 0
    %98 = vmatprep.subr.bf16.mxu0 0
    %99 = vmatpush1.bf16.msra.mxu0 0
    %100 = vmatprep.subr.bf16.mxu0 0
    %101 = vmatpush1.bf16.msra.mxu0 0
    %102 = vmatprep.subr.bf16.mxu0 0
    %103 = vmatpush1.bf16.msra.mxu0 0
    %104 = vmatprep.subr.bf16.mxu0 0
    %105 = vmatpush1.bf16.msra.mxu0 0
    %106 = vmatprep.subr.bf16.mxu0 0
    %107 = vmatpush1.bf16.msra.mxu0 0
    %108 = vmatprep.subr.bf16.mxu0 0
    %109 = vmatpush1.bf16.msra.mxu0 0
    %110 = vmatprep.mubr.bf16.mxu0 0
    %111 = vmatmul.mubr.bf16.gmra.mrb[0].mxu0 %v76
    %v112 = vpop.f32.mrb[0].mxu0
    %v113 = vadd.f32 %v60, %v112
    %v114 = vpop.f32.mrb[0].mxu0
    %v115 = vpop.f32.mrb[0].mxu0
    %v116 = vpop.f32.mrb[0].mxu0
    %117 = vdwg.mxu0
    %v118 = vpack.c.bf16 %v113, %v113
    %v119 = vld [vmem:[#allocation5] sm:$0xf]
    %v120 = vld [vmem:[#allocation5 + $0x4] sm:$0xf]
    %v121 = vld [vmem:[#allocation5 + $0x8] sm:$0xf]
    %v122 = vld [vmem:[#allocation5 + $0xc] sm:$0xf]
    %v123 = vld [vmem:[#allocation5 + $0x10] sm:$0xf]
    %v124 = vld [vmem:[#allocation5 + $0x14] sm:$0xf]
    %v125 = vld [vmem:[#allocation5 + $0x18] sm:$0xf]
    %v126 = vld [vmem:[#allocation5 + $0x1c] sm:$0xf]
    %v127 = vld [vmem:[%s4] sm:$0x1]
    %v129 = vlaneseq
    %v130 = vshrl.u32 %v129, 7
    %v131 = vsub.s32 0, %v130
    %v132 = vrot.slane %v127, %v131
    %v142 = vunpack.c.l.b16 %v119
    %v143 = vunpack.c.l.b16 %v120
    %v144 = vunpack.c.l.b16 %v121
    %v145 = vunpack.c.l.b16 %v122
    %v146 = vunpack.c.l.b16 %v123
    %v147 = vunpack.c.l.b16 %v124
    %v148 = vunpack.c.l.b16 %v125
    %v149 = vunpack.c.l.b16 %v126
    %v150 = vpack.c.b16 %v143, %v142
    %v151 = vpack.c.b16 %v145, %v144
    %v152 = vpack.c.b16 %v147, %v146
    %v153 = vpack.c.b16 %v149, %v148
    %vm158 = vcmask 523264
    %v160 = vsel %vm158, %v118, 0
    %162 = vmatprep.subr.bf16.mxu0 0
    %163 = vmatpush1.bf16.msra.mxu0 %v150
    %164 = vmatprep.subr.bf16.mxu0 0
    %165 = vmatpush1.bf16.msra.mxu0 %v151
    %166 = vmatprep.subr.bf16.mxu0 0
    %167 = vmatpush1.bf16.msra.mxu0 %v152
    %168 = vmatprep.subr.bf16.mxu0 0
    %169 = vmatpush1.bf16.msra.mxu0 %v153
    %170 = vmatprep.subr.bf16.mxu0 0
    %171 = vmatpush1.bf16.msra.mxu0 0
    %172 = vmatprep.subr.bf16.mxu0 0
    %173 = vmatpush1.bf16.msra.mxu0 0
    %174 = vmatprep.subr.bf16.mxu0 0
    %175 = vmatpush1.bf16.msra.mxu0 0
    %176 = vmatprep.subr.bf16.mxu0 0
    %177 = vmatpush1.bf16.msra.mxu0 0
    %178 = vmatprep.subr.bf16.mxu0 0
    %179 = vmatpush1.bf16.msra.mxu0 0
    %180 = vmatprep.subr.bf16.mxu0 0
    %181 = vmatpush1.bf16.msra.mxu0 0
    %182 = vmatprep.subr.bf16.mxu0 0
    %183 = vmatpush1.bf16.msra.mxu0 0
    %184 = vmatprep.subr.bf16.mxu0 0
    %185 = vmatpush1.bf16.msra.mxu0 0
    %186 = vmatprep.subr.bf16.mxu0 0
    %187 = vmatpush1.bf16.msra.mxu0 0
    %188 = vmatprep.subr.bf16.mxu0 0
    %189 = vmatpush1.bf16.msra.mxu0 0
    %190 = vmatprep.subr.bf16.mxu0 0
    %191 = vmatpush1.bf16.msra.mxu0 0
    %192 = vmatprep.subr.bf16.mxu0 0
    %193 = vmatpush1.bf16.msra.mxu0 0
    %194 = vmatprep.mubr.bf16.mxu0 0
    %195 = vmatmul.mubr.bf16.gmra.mrb[0].mxu0 %v160
    %v196 = vpop.f32.mrb[0].mxu0
    %v197 = vadd.f32 %v132, %v196
    %v198 = vpop.f32.mrb[0].mxu0
    %v199 = vpop.f32.mrb[0].mxu0
    %v200 = vpop.f32.mrb[0].mxu0
    %201 = vdwg.mxu0
    %v202 = vmul.f32 %v197, 0.5
    %v203 = vtanh.pop %v202
    %v204 = vmul.f32 %v203, 0.5
    %v205 = vadd.f32 %v204, 0.5
    %206 = vst [vmem:[#allocation7] sm:$0xff] %v205
    // Predicated region
    $region30: #{ensemble_forward.1} parent=1 // pred_check
      _
    $region31: #{ensemble_forward.1} parent=1 // pred_check_branch
      %208 = sbr.rel (0) target = $region33
    $region32: #{ensemble_forward.1} parent=1 // pred_region
      %s210 = ssub.s32 128, 128
      %211 = vsyncadd [#allocation4], %s210
      %s213 = sshll.u32 [#allocation7], 4
      %s214 = int_to_ptr.vmem [resolvable:$true] %s213
      %216 = dma.vmem_to_hbm [thread:$0]  %s214, 128, %s5, [#allocation4]
    $region33: #{ensemble_forward.1} parent=1 // pred_fallthru
      _
    // Predicated region
    $region34: #{ensemble_forward.1} parent=1 // pred_check
      _
    $region35: #{ensemble_forward.1} parent=1 // pred_check_branch
      %218 = sbr.rel (0) target = $region37
    $region36: #{ensemble_forward.1} parent=1 // pred_region
      %219 = dma.done [#allocation4], 128
    $region37: #{ensemble_forward.1} parent=1 // pred_fallthru
      _
    %220 = vsyncpa [#allocation3], 1
    %221 = vsyncpa [#allocation6], 1
    %222 = vsyncpa [#allocation4], 1

</llo_original>
